<compile_context>
chip_gen: v7x
topology: tpu7x:2x2x1
jax: 0.10.0
libtpu: 0.0.40
codegen_flags: <defaults>
</compile_context>

<pallas_src>
import functools
import math

import jax
import jax.numpy as jnp
from jax import lax
from jax.experimental import pallas as pl
from jax.experimental.pallas import tpu as pltpu


# -----------------------------------------------------------------------------
# Generation-aware VMEM budget
# -----------------------------------------------------------------------------
def _detect_vmem_limit():
    cap = 0
    try:
        info = pltpu.get_tpu_info()
        cap = int(getattr(info, "vmem_capacity_bytes", 0) or 0)
    except Exception:
        cap = 0
    if cap <= 0:
        cap = 128 * 1024 * 1024          # v5e / v6e default
    # leave headroom for compiler scratch; v7x (64 MiB) -> 48 MiB, v5e/v6e -> 96 MiB
    return max(min(cap * 3 // 4, 96 * 1024 * 1024), 32 * 1024 * 1024)


_VMEM_LIMIT = _detect_vmem_limit()


def _round8(x):
    return max(8, (x // 8) * 8)


# -----------------------------------------------------------------------------
# Pallas kernel 1: fused MLP chain (1x1 convs) — weights resident in VMEM
# -----------------------------------------------------------------------------
def _mlp_kernel(x_ref, *refs, acts):
    n = len(acts)
    o_ref = refs[2 * n]
    h = x_ref[...]
    if h.dtype != jnp.bfloat16:
        h = h.astype(jnp.bfloat16)
    for li in range(n):
        w = refs[2 * li][...]
        b = refs[2 * li + 1][...]
        acc = jnp.dot(h, w, preferred_element_type=jnp.float32) + b
        a = acts[li]
        if a == "relu":
            acc = jnp.maximum(acc, 0.0)
        elif a == "tanh":
            acc = jnp.tanh(acc)
        h = acc.astype(jnp.bfloat16) if li < n - 1 else acc
    o_ref[...] = h.astype(o_ref.dtype)


def _mlp_row_tile(M, cin, cmax, out_bytes):
    budget = max(_VMEM_LIMIT // 4, 1 << 20)
    per_row = 2 * (cin * 2) + 2 * (cmax * out_bytes) + cmax * 4
    cap = _round8(budget // max(per_row, 1))
    t = min(2048, cap)
    return M if M <= t else t


def pallas_mlp(x, layers, out_dtype=jnp.float32, lane_pad=True):
    """Fused per-row MLP.  x: [M, Cin]; layers: [(W [Cin_i,Cout_i] bf16, b|None, act)].
    Intermediate activations never touch HBM; narrow final Cout is lane-padded
    to 128 for unmasked stores and sliced back in the wrapper."""
    M, Cin = x.shape
    x = x.astype(jnp.bfloat16)                    # halve first-layer DMA bytes
    n = len(layers)
    acts = tuple(a for (_, _, a) in layers)
    Cout = layers[-1][0].shape[1]
    Cout_pad = 128 if (lane_pad and Cout < 128) else Cout

    cmax = max(max(W.shape[1] for (W, _, _) in layers), Cout_pad)
    out_bytes = jnp.dtype(out_dtype).itemsize
    tm = _mlp_row_tile(M, Cin, cmax, out_bytes)

    operands = [x]
    in_specs = [pl.BlockSpec((tm, Cin), lambda i: (i, 0))]
    for li, (W, b, _) in enumerate(layers):
        ci, co = W.shape
        if li == n - 1 and Cout_pad != co:
            W = jnp.pad(W, ((0, 0), (0, Cout_pad - co)))
            b = None if b is None else jnp.pad(b, (0, Cout_pad - co))
            co = Cout_pad
        bias = jnp.zeros((co,), jnp.float32) if b is None else b.astype(jnp.float32)
        operands += [W.astype(jnp.bfloat16), bias.reshape(1, co)]
        in_specs += [pl.BlockSpec((ci, co), lambda i: (0, 0)),
                     pl.BlockSpec((1, co), lambda i: (0, 0))]

    out = pl.pallas_call(
        functools.partial(_mlp_kernel, acts=acts),
        out_shape=jax.ShapeDtypeStruct((M, Cout_pad), out_dtype),
        grid=(pl.cdiv(M, tm),),
        in_specs=in_specs,
        out_specs=pl.BlockSpec((tm, Cout_pad), lambda i: (i, 0)),
        compiler_params=pltpu.CompilerParams(
            dimension_semantics=("parallel",),
            vmem_limit_bytes=_VMEM_LIMIT),
    )(*operands)
    return out[:, :Cout] if Cout_pad != Cout else out


# -----------------------------------------------------------------------------
# Pallas kernel 2: DGCNN edge-conv fused with the neighbour max
# -----------------------------------------------------------------------------
def _edgeconv_max_kernel(n_ref, c_ref, wn_ref, wc_ref, o_ref, cacc_ref):
    j = pl.program_id(1)

    @pl.when(j == 0)
    def _():
        cacc_ref[...] = jnp.dot(c_ref[...].astype(jnp.bfloat16), wc_ref[...],
                                preferred_element_type=jnp.float32)

    acc = jnp.dot(n_ref[0].astype(jnp.bfloat16), wn_ref[...],
                  preferred_element_type=jnp.float32) + cacc_ref[...]
    acc = jnp.maximum(acc, 0.0).astype(o_ref.dtype)

    @pl.when(j == 0)
    def _():
        o_ref[...] = acc

    @pl.when(j > 0)
    def _():
        o_ref[...] = jnp.maximum(o_ref[...], acc)


def _edgeconv_row_tile(R, cin, cout):
    budget = max(_VMEM_LIMIT // 4, 1 << 20)
    per_row = 2 * (2 * cin * 2) + 2 * (cout * 2) + cout * 4
    cap = _round8(budget // max(per_row, 1))
    t = min(2048, cap)
    return R if R <= t else t


def edgeconv_max(neigh_km, center, wn, wc, out_dtype=jnp.bfloat16):
    """neigh_km: [k, R, C] neighbour-major, center: [R, C], wn/wc: [C, Cout] bf16.
    Returns max_k relu(neigh_k @ Wn + center @ Wc) : [R, Cout]."""
    k, R, C = neigh_km.shape
    Cout = wn.shape[1]
    tg = _edgeconv_row_tile(R, C, Cout)
    return pl.pallas_call(
        _edgeconv_max_kernel,
        out_shape=jax.ShapeDtypeStruct((R, Cout), out_dtype),
        grid=(pl.cdiv(R, tg), k),
        in_specs=[pl.BlockSpec((1, tg, C), lambda i, j: (j, i, 0)),
                  pl.BlockSpec((tg, C), lambda i, j: (i, 0)),
                  pl.BlockSpec((C, Cout), lambda i, j: (0, 0)),
                  pl.BlockSpec((C, Cout), lambda i, j: (0, 0))],
        out_specs=pl.BlockSpec((tg, Cout), lambda i, j: (i, 0)),
        scratch_shapes=[pltpu.VMEM((tg, Cout), jnp.float32)],
        compiler_params=pltpu.CompilerParams(
            dimension_semantics=("parallel", "arbitrary"),
            vmem_limit_bytes=_VMEM_LIMIT),
    )(neigh_km, center, wn, wc)


# -----------------------------------------------------------------------------
# Pallas kernel 3: kNN distances (ref side channels-first / lane-dense)
# -----------------------------------------------------------------------------
def _nn_dist_kernel(q_ref, r_ref, sr_ref, o_ref):
    # q_ref: (1, tq, C), r_ref: (1, C, tnr), sr_ref: (1, 1, tnr)
    g = lax.dot_general(q_ref[0], r_ref[0], (((1,), (0,)), ((), ())),
                        preferred_element_type=jnp.float32)     # (tq, tnr)
    # |q|^2 dropped: constant per row, does not affect neighbour ordering.
    o_ref[0] = sr_ref[0] - 2.0 * g


def _knn_tiles(Nq, Nr):
    tnr = Nr if Nr <= 8192 else 8192
    budget = max(_VMEM_LIMIT // 4, 1 << 20)
    cap = _round8(budget // max(2 * 4 * tnr, 1))
    tq = Nq if Nq <= cap else min(cap, 1024)
    return tq, tnr


def pallas_knn_dist(query_cl, ref_cf, sr):
    B, Nq, C = query_cl.shape
    Nr = ref_cf.shape[2]
    tq, tnr = _knn_tiles(Nq, Nr)
    return pl.pallas_call(
        _nn_dist_kernel,
        out_shape=jax.ShapeDtypeStruct((B, Nq, Nr), jnp.float32),
        grid=(B, pl.cdiv(Nq, tq), pl.cdiv(Nr, tnr)),
        in_specs=[pl.BlockSpec((1, tq, C), lambda b, i, j: (b, i, 0)),
                  pl.BlockSpec((1, C, tnr), lambda b, i, j: (b, 0, j)),
                  pl.BlockSpec((1, 1, tnr), lambda b, i, j: (b, 0, j))],
        out_specs=pl.BlockSpec((1, tq, tnr), lambda b, i, j: (b, i, j)),
        compiler_params=pltpu.CompilerParams(
            dimension_semantics=("parallel", "parallel", "parallel"),
            vmem_limit_bytes=_VMEM_LIMIT),
    )(query_cl, ref_cf, sr)


def knnquery(k, ref_cl, query_cl):
    """Indices of the k nearest ref points per query (self included), like
    pointops.knnquery_heap / torch knn.
    # TODO(synk): the running top-k is not fused into the distance kernel yet;
    # the [B, Nq, Nr] matrix is materialized and lax.top_k runs in XLA."""
    ref_cf = jnp.swapaxes(ref_cl, 1, 2).astype(jnp.bfloat16)     # [B, 3, Nr]
    sr = jnp.sum(ref_cl.astype(jnp.float32) ** 2, axis=-1)[:, None, :]
    d = pallas_knn_dist(query_cl.astype(jnp.bfloat16), ref_cf, sr)
    _, idx = lax.top_k(-d, k)
    return idx


# -----------------------------------------------------------------------------
# Pallas kernel 4: fused Chamfer min-distance (never materializes Na x Nb)
# -----------------------------------------------------------------------------
def _min_dist_kernel(a_ref, b_ref, sb_ref, o_ref, *, nb_total, tnb):
    j = pl.program_id(2)
    g = lax.dot_general(a_ref[0], b_ref[0], (((1,), (0,)), ((), ())),
                        preferred_element_type=jnp.float32)     # (tna, tnb)
    d = sb_ref[0] - 2.0 * g
    col = lax.broadcasted_iota(jnp.int32, d.shape, 1) + j * tnb
    d = jnp.where(col < nb_total, d, jnp.inf)                   # mask ragged Nb tile
    m = jnp.min(d, axis=-1, keepdims=True)

    @pl.when(j == 0)
    def _():
        o_ref[0] = m

    @pl.when(j > 0)
    def _():
        o_ref[0] = jnp.minimum(o_ref[0], m)


def _min_tiles(Na, Nb):
    tnb = Nb if Nb <= 2048 else 2048
    budget = max(_VMEM_LIMIT // 6, 1 << 20)
    cap = _round8(budget // max(4 * tnb, 1))
    tna = Na if Na <= cap else min(cap, 512)
    return tna, tnb


def pallas_min_sqdist(a_cl, b_cf):
    """min_j ||a_i - b_j||^2. a_cl: [B, Na, 3], b_cf: [B, 3, Nb] -> [B, Na] (f32)."""
    B, Na, C = a_cl.shape
    Nb = b_cf.shape[2]
    a_cl = a_cl.astype(jnp.float32)
    b_cf = b_cf.astype(jnp.float32)
    sb = jnp.sum(b_cf * b_cf, axis=1)[:, None, :]                # [B, 1, Nb]
    sa = jnp.sum(a_cl * a_cl, axis=-1)                           # [B, Na]
    tna, tnb = _min_tiles(Na, Nb)
    out = pl.pallas_call(
        functools.partial(_min_dist_kernel, nb_total=Nb, tnb=tnb),
        out_shape=jax.ShapeDtypeStruct((B, Na, 1), jnp.float32),
        grid=(B, pl.cdiv(Na, tna), pl.cdiv(Nb, tnb)),
        in_specs=[pl.BlockSpec((1, tna, C), lambda b, i, j: (b, i, 0)),
                  pl.BlockSpec((1, C, tnb), lambda b, i, j: (b, 0, j)),
                  pl.BlockSpec((1, 1, tnb), lambda b, i, j: (b, 0, j))],
        out_specs=pl.BlockSpec((1, tna, 1), lambda b, i, j: (b, i, 0)),
        compiler_params=pltpu.CompilerParams(
            dimension_semantics=("parallel", "parallel", "arbitrary"),
            vmem_limit_bytes=_VMEM_LIMIT),
    )(a_cl, b_cf, sb)
    return out[..., 0] + sa          # add back |a|^2 outside the min


# -----------------------------------------------------------------------------
# Pallas kernel 5: entropy-bottleneck quantise + likelihood
# -----------------------------------------------------------------------------
_EB_EP = math.exp(0.5)
_EB_EM = math.exp(-0.5)
_EB_SCALE = _EB_EP - _EB_EM


def _eb_kernel(x_ref, hat_ref, lik_ref):
    x = x_ref[...]
    hat = jnp.round(x)
    # sigmoid(h+0.5) - sigmoid(h-0.5) is even in h: one exp + one divide
    u = jnp.exp(-jnp.abs(hat))
    denom = (1.0 + u * _EB_EM) * (1.0 + u * _EB_EP)
    lik = (u * _EB_SCALE) / denom            # exact divide — value feeds the bpp loss
    hat_ref[...] = hat
    lik_ref[...] = jnp.maximum(lik, 1e-9)


def entropy_bottleneck(x):
    """Deterministic stand-in for compressai's EntropyBottleneck.  x: [B, C, N].
    # TODO(synk): the learned factorized prior (and noise/STE quantiser) has no
    # in-script equivalent; round quantisation + standard-logistic CDF is used."""
    B, C, N = x.shape
    R = B * C
    x2 = x.reshape(R, N).astype(jnp.float32)
    tr = R if R <= 512 else 512
    tn = N if N <= 4096 else 4096
    hat, lik = pl.pallas_call(
        _eb_kernel,
        out_shape=(jax.ShapeDtypeStruct((R, N), jnp.float32),
                   jax.ShapeDtypeStruct((R, N), jnp.float32)),
        grid=(pl.cdiv(R, tr), pl.cdiv(N, tn)),
        in_specs=[pl.BlockSpec((tr, tn), lambda i, j: (i, j))],
        out_specs=(pl.BlockSpec((tr, tn), lambda i, j: (i, j)),
                   pl.BlockSpec((tr, tn), lambda i, j: (i, j))),
        compiler_params=pltpu.CompilerParams(
            dimension_semantics=("parallel", "parallel"),
            vmem_limit_bytes=_VMEM_LIMIT),
    )(x2)
    return hat.reshape(B, C, N), lik.reshape(B, C, N)


# -----------------------------------------------------------------------------
# JAX glue: gathers, patch-knn, fps, position encoding
# -----------------------------------------------------------------------------
def gather_neighbors(data_cl, idx):
    # data_cl [B, N, C], idx [B, S, K] -> [B, S, K, C]
    return jax.vmap(lambda d, i: d[i])(data_cl, idx)


def _gather_neighbors_kmajor(data_cl, idx):
    # data_cl [B, N, C], idx [B, N, K] -> [K, B, N, C] (neighbour-major)
    idx_t = jnp.transpose(idx, (2, 0, 1))
    return jax.vmap(lambda ii: jax.vmap(lambda d, i: d[i])(data_cl, ii))(idx_t)


def indexing_by_id(data, idx):
    # data [B, N, F], idx [B, M, 1] -> [B, M, F]
    return jax.vmap(lambda d, i: d[i[:, 0]])(data, idx)


def gather_points(pts, idx):
    # pts [B, N, C], idx [B, M] -> [B, M, C]
    return jax.vmap(lambda p, i: p[i])(pts, idx)


def _patch_knn_idx(x_cl, k):
    # tiny per-patch self-knn (Np is small): plain JAX is the right tool here
    xf = x_cl.astype(jnp.float32)
    sq = jnp.sum(xf * xf, axis=-1)
    g = jnp.einsum("bic,bjc->bij", xf, xf)
    d = sq[:, :, None] - 2.0 * g + sq[:, None, :]
    return lax.top_k(-d, k)[1]


def furthest_point_sample(pts, n_samples):
    # pts: [B, N, 3] -> idx [B, n_samples]
    # TODO(synk): serial argmax loop kept in plain JAX; a VMEM-resident Pallas
    # version would help for very large clouds.
    N = pts.shape[1]

    def one(p):
        def body(i, carry):
            dist, last, idxs = carry
            d = jnp.sum((p - p[last]) ** 2, axis=-1)
            dist = jnp.minimum(dist, d)
            nxt = jnp.argmax(dist).astype(jnp.int32)
            idxs = idxs.at[i].set(nxt)
            return (dist, nxt, idxs)

        init = (jnp.full((N,), 1e10, jnp.float32), jnp.int32(0),
                jnp.zeros((n_samples,), jnp.int32))
        _, _, idxs = lax.fori_loop(1, n_samples, body, init)
        return idxs

    return jax.vmap(one)(pts)


def position_encoding(uv, L):
    out = [uv]
    for i in range(L):
        out.append(jnp.sin(uv * (2 ** i) * 3.14159265))
        out.append(jnp.cos(uv * (2 ** i) * 3.14159265))
    return jnp.concatenate(out, axis=-1)


def fix_sample(B, num_point):
    pts = jnp.array([[-1., -1.], [-1., 1.], [1., -1.], [1., 1.]], jnp.float32)
    return jnp.broadcast_to(pts[None, None], (B, num_point, 4, 2))


def uniform_random_sample(key, B, num_point, up_ratio):
    res = jax.random.uniform(key, (B * num_point, 4 * up_ratio, 3), jnp.float32) * 2 - 1
    res = res.at[:, :, 2:].set(0.0)
    fid = furthest_point_sample(res, up_ratio)
    gathered = gather_points(res, fid)
    return gathered[:, :, :2].reshape(B, num_point, up_ratio, 2)


# -----------------------------------------------------------------------------
# Model blocks (channels-last internally)
# -----------------------------------------------------------------------------
def dgcnn_forward(p, x, if_relu_atlast=False):
    """DGCNN_multi_knn_c5 (if_bn == False).  x: [Be, Np, 3] -> [Be, Np, emb] bf16."""
    Be, Np, _ = x.shape
    x = x.astype(jnp.bfloat16)
    kk = 4 if Np >= 4 else Np

    def stage(feat, wpair):
        C = feat.shape[-1]
        idx = _patch_knn_idx(feat, kk)                          # [Be, Np, k]
        neigh = _gather_neighbors_kmajor(feat, idx)             # [k, Be, Np, C]
        out = edgeconv_max(neigh.reshape(kk, Be * Np, C),
                           feat.reshape(Be * Np, C), wpair[0], wpair[1])
        return out.reshape(Be, Np, -1)

    x1 = stage(x, p["conv1"])
    x2 = stage(x1, p["conv2"])
    x3 = stage(x2, p["conv3"])
    x4 = stage(x3, p["conv4"])
    xc = jnp.concatenate([x1, x2, x3, x4], axis=-1)             # [Be, Np, 512] bf16
    act = "relu" if if_relu_atlast else "tanh"
    out = pallas_mlp(xc.reshape(Be * Np, xc.shape[-1]),
                     [(p["conv5_w"], None, act)],
                     out_dtype=jnp.bfloat16, lane_pad=False)
    return out.reshape(Be, Np, -1)


def seq_gn_forward(p, x_cf, ngroups):
    # Conv1d -> GroupNorm -> ReLU -> Conv1d  (GN statistics are global over N: JAX)
    B, C, N = x_cf.shape
    h_in = jnp.transpose(x_cf, (0, 2, 1)).reshape(B * N, C)
    h = pallas_mlp(h_in, [(p["w1"], p["b1"], "none")], out_dtype=jnp.float32)
    hid = p["w1"].shape[1]
    hg = h.reshape(B, N, ngroups, hid // ngroups)
    mean = jnp.mean(hg, axis=(1, 3), keepdims=True)
    var = jnp.var(hg, axis=(1, 3), keepdims=True)
    hg = (hg - mean) * lax.rsqrt(var + 1e-5)
    h = hg.reshape(B, N, hid) * p["gamma"] + p["beta"]
    h = jnp.maximum(h, 0.0).reshape(B * N, hid)
    h = pallas_mlp(h, [(p["w2"], p["b2"], "none")], out_dtype=jnp.float32)
    return jnp.transpose(h.reshape(B, N, -1), (0, 2, 1))


def encoder_forward(p, xyz, args):
    # xyz: [B, 3, N] -> (points_sparse [B, 3, np], feat [B, dim, np])
    xyz_t = jnp.transpose(xyz, (0, 2, 1))                       # [B, N, 3]
    B, N, _ = xyz_t.shape
    dsn = args["training_up_ratio"]
    num_point = round(N / dsn)
    # NOTE: original reuses batch-0 fps ids for all batches (only valid for B==1);
    # here fps is taken per batch.
    fps_id = furthest_point_sample(xyz_t, num_point)
    points_sparse = gather_points(xyz_t, fps_id)                # [B, np, 3]

    idx = knnquery(dsn + 1, xyz_t, points_sparse)[:, :, 1:]
    patch = gather_neighbors(xyz_t, idx) - points_sparse[:, :, None, :]
    local_emb = dgcnn_forward(p["dgcnn_local"],
                              patch.reshape(B * num_point, dsn, 3))
    local_emb = jnp.max(local_emb, axis=1).reshape(B, num_point, -1)

    k = args["neighbor_k"]
    idx2 = knnquery(k + 1, points_sparse, points_sparse)[:, :, 1:k + 1]
    patch2 = gather_neighbors(points_sparse, idx2) - points_sparse[:, :, None, :]
    sp_emb = dgcnn_forward(p["dgcnn_sparse"],
                           patch2.reshape(B * num_point, k, 3))
    sp_emb = jnp.max(sp_emb, axis=1).reshape(B, num_point, -1)

    merged = jnp.concatenate([sp_emb, local_emb], axis=-1)      # [B, np, 2*emb] bf16
    feat = pallas_mlp(merged.reshape(B * num_point, -1), p["merge"],
                      out_dtype=jnp.float32)
    feat = jnp.transpose(feat.reshape(B, num_point, -1), (0, 2, 1))   # [B, dim, np]
    return jnp.transpose(points_sparse, (0, 2, 1)), feat


def convert_uv_to_xyz(p, uv, uv_idx, sparse_embedding, points_sparse, args):
    B, M, _ = uv.shape
    L = args["pe_out_L"]
    enc = position_encoding(uv.reshape(-1, 2), L).reshape(B, M, -1)   # [B, M, 4L+2]
    feat = indexing_by_id(sparse_embedding, uv_idx)                   # [B, M, emb+dim]
    coding = jnp.concatenate([feat, enc], axis=-1)
    out_p = pallas_mlp(coding.reshape(B * M, -1), p["fit"],
                       out_dtype=jnp.float32).reshape(B, M, 3)
    centers = indexing_by_id(points_sparse, uv_idx)                   # [B, M, 3]
    return out_p + centers


def decoder_forward(p, points_sparse_cf, latent_feats, args, key):
    ps = jnp.transpose(points_sparse_cf, (0, 2, 1))             # [B, np, 3]
    B, num_point, _ = ps.shape
    up_ratio = args["training_up_ratio"]
    over = int(up_ratio * args["over_sampling_scale"])
    uv1 = uniform_random_sample(key, B, num_point, over - 4)
    uv2 = fix_sample(B, num_point)
    uv = jnp.concatenate([uv1, uv2], axis=2)                    # [B, np, over, 2]

    k = args["neighbor_k"]
    idx = knnquery(k + 1, ps, ps)[:, :, 1:]
    patch = gather_neighbors(ps, idx) - ps[:, :, None, :]
    emb = dgcnn_forward(p["dgcnn"], patch.reshape(B * num_point, k, 3))
    emb = jnp.max(emb, axis=1).reshape(B, num_point, -1)        # [B, np, emb]
    sparse_embedding = jnp.concatenate(
        [emb.astype(jnp.float32), jnp.transpose(latent_feats, (0, 2, 1))], axis=2)

    uv_idx = jnp.broadcast_to(jnp.arange(num_point).reshape(1, -1, 1),
                              (B, num_point, over)).reshape(B, -1, 1)
    upsampled = convert_uv_to_xyz(p, uv.reshape(B, -1, 2), uv_idx,
                                  sparse_embedding, ps, args)
    fps_id = furthest_point_sample(upsampled, up_ratio * num_point)
    querying = gather_points(upsampled, fps_id)
    return upsampled, querying


def chamfer_loss(pred_cl, gt_cf):
    # TODO(synk): CDLoss class body not provided; standard symmetric Chamfer used.
    pred_cf = jnp.swapaxes(pred_cl, 1, 2)
    gt_cl = jnp.swapaxes(gt_cf, 1, 2)
    d_pg = pallas_min_sqdist(pred_cl, gt_cf)                    # [B, Npred]
    d_gp = pallas_min_sqdist(gt_cl, pred_cf)                    # [B, Ngt]
    return jnp.mean(d_pg) + jnp.mean(d_gp)


def get_model_forward(params, xyz, args, key):
    xyz = xyz[:, 0:3, :]
    points_num = xyz.shape[0] * xyz.shape[2]
    points_sparse, points_sparse_feats = encoder_forward(params["encoder"], xyz, args)

    latent_feats_hat, feats_lik = entropy_bottleneck(points_sparse_feats)
    feats_bpp = jnp.sum(jnp.log(feats_lik)) / (-math.log(2)) / points_num

    gt_latent_xyzs = points_sparse
    analyzed = seq_gn_forward(params["xyz_analysis"], points_sparse, args["ngroups"])
    analyzed_hat, xyzs_lik = entropy_bottleneck(analyzed)
    pred_latent_xyzs = seq_gn_forward(params["xyz_synthesis"], analyzed_hat, args["ngroups"])
    xyzs_bpp = jnp.sum(jnp.log(xyzs_lik)) / (-math.log(2)) / points_num

    upsampled_p, querying_points_3d = decoder_forward(
        params["decoder"], pred_latent_xyzs, latent_feats_hat, args, key)

    cd = chamfer_loss(upsampled_p, xyz)
    latent_xyzs_loss = jnp.mean((gt_latent_xyzs - pred_latent_xyzs) ** 2)
    bpp = feats_bpp + xyzs_bpp
    total_loss = cd + latent_xyzs_loss * args["latent_xyzs_coe"] + bpp * args["bpp_lambda"]
    loss_stages = {"cd_loss": cd, "latent_xyzs_loss": latent_xyzs_loss, "bpp_loss": bpp}
    return (upsampled_p, querying_points_3d, total_loss, loss_stages, bpp,
            points_sparse, pred_latent_xyzs)


# -----------------------------------------------------------------------------
# Deterministic parameter init (weights pre-transposed to [Cin, Cout] and bf16)
# -----------------------------------------------------------------------------
def _xavier(key, out_in, gain=1.0):
    fan_out, fan_in = out_in
    std = gain * math.sqrt(2.0 / (fan_in + fan_out))
    return jax.random.normal(key, (fan_out, fan_in), jnp.float32) * std


def _linear_param(key, cin, cout):
    return jnp.transpose(_xavier(key, (cout, cin))).astype(jnp.bfloat16)   # [Cin, Cout]


def _init_dgcnn(key, emb_dims):
    ks = jax.random.split(key, 5)

    def edge(k, cin, cout):
        w = jnp.transpose(_xavier(k, (cout, 2 * cin))).astype(jnp.bfloat16)  # [2C, Cout]
        return (w[:cin], w[cin:])           # (neighbour-half, center-half)

    return {
        "conv1": edge(ks[0], 3, 64),
        "conv2": edge(ks[1], 64, 64),
        "conv3": edge(ks[2], 64, 128),
        "conv4": edge(ks[3], 128, 256),
        "conv5_w": _linear_param(ks[4], 512, emb_dims),
    }


def _init_mlp(key, dims, acts):
    ks = jax.random.split(key, len(dims) - 1)
    return [(_linear_param(ks[i], dims[i], dims[i + 1]),
             jnp.zeros((dims[i + 1],), jnp.float32), acts[i])
            for i in range(len(dims) - 1)]


def init_params(key, args):
    ks = jax.random.split(key, 9)
    emb, dim, hid = args["emb_dims"], args["dim"], args["hidden_dim"]
    mlp = args["mlp_fitting"]
    coding_dim = 4 * args["pe_out_L"] + 2
    enc = {
        "dgcnn_sparse": _init_dgcnn(ks[0], emb),
        "dgcnn_local": _init_dgcnn(ks[1], emb),
        "merge": _init_mlp(ks[2], [2 * emb] + mlp + [dim],
                           ["relu"] * len(mlp) + ["none"]),
    }
    dec = {
        "dgcnn": _init_dgcnn(ks[3], emb),
        "fit": _init_mlp(ks[4], [emb + coding_dim + dim] + mlp + [3],
                         ["relu"] * len(mlp) + ["none"]),
    }
    xa = {"w1": _linear_param(ks[5], 3, hid), "b1": jnp.zeros((hid,), jnp.float32),
          "gamma": jnp.ones((hid,), jnp.float32), "beta": jnp.zeros((hid,), jnp.float32),
          "w2": _linear_param(ks[6], hid, dim), "b2": jnp.zeros((dim,), jnp.float32)}
    xs = {"w1": _linear_param(ks[7], dim, hid), "b1": jnp.zeros((hid,), jnp.float32),
          "gamma": jnp.ones((hid,), jnp.float32), "beta": jnp.zeros((hid,), jnp.float32),
          "w2": _linear_param(ks[8], hid, 3), "b2": jnp.zeros((3,), jnp.float32)}
    return {"encoder": enc, "decoder": dec, "xyz_analysis": xa, "xyz_synthesis": xs}


# -----------------------------------------------------------------------------
if __name__ == "__main__":
    args = dict(
        emb_dims=64, mlp_fitting=[64, 64], pe_out_L=2, dim=8, neighbor_k=4,
        training_up_ratio=4, over_sampling_scale=2.0, if_bn=False,
        hidden_dim=16, ngroups=4, latent_xyzs_coe=1.0, bpp_lambda=1e-3,
    )
    key = jax.random.PRNGKey(0)
    kp, kx, kd = jax.random.split(key, 3)
    params = init_params(kp, args)

    B, N = 2, 32
    xyz = jax.random.normal(kx, (B, 3, N), jnp.float32)

    outs = get_model_forward(params, xyz, args, kd)
    (upsampled_p, querying_points_3d, total_loss, loss_stages, bpp,
     points_sparse, pred_latent_xyzs) = outs
    jax.block_until_ready((upsampled_p, querying_points_3d, total_loss, bpp,
                           points_sparse, pred_latent_xyzs))
    assert upsampled_p.shape == (B, 8 * 8, 3)
    assert querying_points_3d.shape == (B, 4 * 8, 3)
    print("KERNEL_OK")
</pallas_src>

<mosaic_0001>
module attributes {stable_mosaic.version = 11 : i64} {
  func.func @_nn_dist_kernel(%arg0: i32, %arg1: i32, %arg2: i32, %arg3: memref<1x8x3xbf16, #tpu.memory_space<vmem>>, %arg4: memref<1x3x32xbf16, #tpu.memory_space<vmem>>, %arg5: memref<1x1x32xf32, #tpu.memory_space<vmem>>, %arg6: memref<1x8x32xf32, #tpu.memory_space<vmem>>) attributes {dimension_semantics = [#tpu.dimension_semantics<parallel>, #tpu.dimension_semantics<parallel>, #tpu.dimension_semantics<parallel>], iteration_bounds = array<i64: 2, 1, 1>, scalar_prefetch = 0 : i64, scratch_operands = 0 : i64, tpu.core_type = #tpu.core_type<tc>, window_params = [{transform_indices = @transform_0, window_bounds = array<i64: 1, 8, 3>}, {transform_indices = @transform_1, window_bounds = array<i64: 1, 3, 32>}, {transform_indices = @transform_2, window_bounds = array<i64: 1, 1, 32>}, {transform_indices = @transform_3, window_bounds = array<i64: 1, 8, 32>}]} {
    %c0 = arith.constant 0 : index
    %c0_0 = arith.constant 0 : index
    %c0_1 = arith.constant 0 : index
    %0 = vector.load %arg3[%c0, %c0_0, %c0_1] : memref<1x8x3xbf16, #tpu.memory_space<vmem>>, vector<1x8x3xbf16>
    %1 = vector.shape_cast %0 : vector<1x8x3xbf16> to vector<8x3xbf16>
    %c0_2 = arith.constant 0 : index
    %c0_3 = arith.constant 0 : index
    %c0_4 = arith.constant 0 : index
    %2 = vector.load %arg4[%c0_2, %c0_3, %c0_4] : memref<1x3x32xbf16, #tpu.memory_space<vmem>>, vector<1x3x32xbf16>
    %3 = vector.shape_cast %2 : vector<1x3x32xbf16> to vector<3x32xbf16>
    %cst = arith.constant dense<0.000000e+00> : vector<8x32xf32>
    %4 = tpu.matmul %1, %3, %cst {dimension_numbers = #tpu.dot_dimension_numbers<[1], [0], [0], [1], [0, 0, 1, 1], [], []>} : vector<8x3xbf16>, vector<3x32xbf16>, vector<8x32xf32> -> vector<8x32xf32>
    %c0_5 = arith.constant 0 : index
    %c0_6 = arith.constant 0 : index
    %c0_7 = arith.constant 0 : index
    %5 = vector.load %arg5[%c0_5, %c0_6, %c0_7] : memref<1x1x32xf32, #tpu.memory_space<vmem>>, vector<1x1x32xf32>
    %6 = vector.shape_cast %5 : vector<1x1x32xf32> to vector<1x32xf32>
    %cst_8 = arith.constant 2.000000e+00 : f32
    %7 = vector.broadcast %cst_8 : f32 to vector<8x32xf32>
    %8 = arith.mulf %7, %4 : vector<8x32xf32>
    %9 = vector.broadcast %6 : vector<1x32xf32> to vector<8x32xf32>
    %10 = arith.subf %9, %8 : vector<8x32xf32>
    %c0_9 = arith.constant 0 : index
    %c0_10 = arith.constant 0 : index
    %c0_11 = arith.constant 0 : index
    %11 = vector.load %arg6[%c0_9, %c0_10, %c0_11] : memref<1x8x32xf32, #tpu.memory_space<vmem>>, vector<1x8x32xf32>
    %12 = vector.shape_cast %11 : vector<1x8x32xf32> to vector<8x32xf32>
    %13 = vector.shape_cast %10 : vector<8x32xf32> to vector<1x8x32xf32>
    tpu.vector_store %arg6[%c0_9, %c0_10, %c0_11], %13 {strides = array<i32>} : memref<1x8x32xf32, #tpu.memory_space<vmem>>, vector<1x8x32xf32>,
    return
  }
  func.func @transform_0(%arg0: i32, %arg1: i32, %arg2: i32) -> (i32, i32, i32) {
    %c0_i32 = arith.constant 0 : i32
    %c0_i32_0 = arith.constant 0 : i32
    return %arg0, %arg1, %c0_i32 : i32, i32, i32
  }
  func.func @transform_1(%arg0: i32, %arg1: i32, %arg2: i32) -> (i32, i32, i32) {
    %c0_i32 = arith.constant 0 : i32
    %c0_i32_0 = arith.constant 0 : i32
    return %arg0, %c0_i32, %arg2 : i32, i32, i32
  }
  func.func @transform_2(%arg0: i32, %arg1: i32, %arg2: i32) -> (i32, i32, i32) {
    %c0_i32 = arith.constant 0 : i32
    %c0_i32_0 = arith.constant 0 : i32
    return %arg0, %c0_i32, %arg2 : i32, i32, i32
  }
  func.func @transform_3(%arg0: i32, %arg1: i32, %arg2: i32) -> (i32, i32, i32) {
    %c0_i32 = arith.constant 0 : i32
    return %arg0, %arg1, %arg2 : i32, i32, i32
  }
}

</mosaic_0001>

<llo_original>
// kernel: tpu_custom_call.1
$region0: #{tpu_custom_call.1}
  #allocation0 [shape = 'u32[]', space=smem, size = 0x4, offset = 0x4, fixed_abs, tag = 'smem constant byte address 0x4 - core index']
  #allocation1 [shape = 'u32[144,128]{1,0:T(1,128)}', space=vmem, size = 0x12000, scoped, tag = 'internal scratch']
  %s0 = inlined_call_operand.hbm [shape: bf16[2,8,3], index: 0, kind: input, shape index: {}]
  %s1 = inlined_call_operand.hbm [shape: bf16[2,3,32], index: 1, kind: input, shape index: {}]
  %s2 = inlined_call_operand.hbm [shape: f32[2,1,32], index: 2, kind: input, shape index: {}]
  %s3 = inlined_call_operand.hbm [shape: f32[2,8,32], index: 3, kind: output, shape index: {}]
  %s4 = sld [smem:[#allocation0]]
  $region57: #{tpu_custom_call.1} parent=0
    _
  %s6 = ssub.s32 1, %s4
  %s7 = scalar_select 0, %s6, %s4
  $region1: #{tpu_custom_call.1} parent=0
    #allocation2 [shape = 'u8[4096]{0}', space=vmem, size = 0x1000, scoped, tag = 'input window, operand 0']
    #allocation3 [shape = 's32[2]{0}', space=sflag, size = 0x8, scoped, tag = 'scoped memory for tpu_custom_call.1']
    #allocation4 [shape = 's32[2]{0}', space=sflag, size = 0x8, scoped, tag = 'scoped memory for tpu_custom_call.1']
    #allocation5 [shape = 'u8[2048]{0}', space=vmem, size = 0x800, scoped, tag = 'input window, operand 1']
    #allocation6 [shape = 's32[2]{0}', space=sflag, size = 0x8, scoped, tag = 'scoped memory for tpu_custom_call.1']
    #allocation7 [shape = 'u8[1024]{0}', space=vmem, size = 0x400, scoped, tag = 'input window, operand 2']
    #allocation8 [shape = 'u8[8192]{0}', space=vmem, size = 0x2000, scoped, tag = 'output window, operand 0']
    %8 = vsyncpa [#allocation3], 0
    %s9 = scalar_lea.sflag [#allocation3], 1
    %10 = vsyncpa %s9, 0
    %11 = vsyncpa [#allocation6], 0
    %s12 = scalar_lea.sflag [#allocation6], 1
    %13 = vsyncpa %s12, 0
    %14 = vsyncpa [#allocation4], 0
    %s15 = scalar_lea.sflag [#allocation4], 1
    %16 = vsyncpa %s15, 0
    loop: start=0, step=1, limit=4
    $region2: #{tpu_custom_call.1} parent=1 // loop_pre_header
      _
    $region3: #{tpu_custom_call.1} parent=1 // loop_header
      %s18 = sphi 0, %s22
      %p19 = scmp.ge.s32.totalorder %s18, 4
      %s25 = sphi 0, %s44
      %s26 = sphi 0, %s40
      %s27 = sphi 0, %s36
      %s28 = sphi 0, %s25
      %s29 = sphi 0, %s26
      %s30 = sphi 0, %s27
      %s31 = sphi 0, %s28
      %s32 = sphi 0, %s29
      %s33 = sphi 0, %s30
      %s49 = sphi 0, %s51
      %s52 = sphi 0, %s49
      %s53 = sphi 0, %s52
      %s69 = sphi 0, %s53
      %s77 = sphi 0, %s79
      %s80 = sphi 0, %s77
      %s81 = sphi 0, %s80
      %s97 = sphi 0, %s81
      %s105 = sphi 0, %s107
      %s108 = sphi 0, %s105
      %s109 = sphi 0, %s108
      %s125 = sphi 0, %s109
      %s135 = sphi 0, %s137
      %s138 = sphi 0, %s135
      %s139 = sphi 0, %s138
      %s155 = sphi 0, %s139
    $region4: #{tpu_custom_call.1} parent=1 // loop_header_branch
      %21 = sbr.rel (%p19) target = $region8
    $region5: #{tpu_custom_call.1} parent=1 // loop_body
      %s23 = ssub.s32 %s18, 1
      %s24 = ssub.s32 %s18, 2
      %s34 = sadd.s32 1, %s27
      %p35 = scmp.ge.s32.totalorder %s34, 1
      %s36 = scalar_select %p35, 0, %s34
      %s37 = sadd.s32 1, %s26
      %s38 = scalar_select %p35, %s37, %s26
      %p39 = scmp.ge.s32.totalorder %s38, 1
      %s40 = scalar_select %p39, 0, %s38
      %s41 = sadd.s32 1, %s25
      %s42 = scalar_select %p39, %s41, %s25
      %p43 = scmp.ge.s32.totalorder %s42, 2
      %s44 = scalar_select %p43, 0, %s42
      %s45 = ssub.s32 %s25, %s44
      %s46 = ssub.s32 %s26, %s40
      %s47 = sor.u32 %s45, %s46
      %p48 = scmp.eq.s32.totalorder %s47, 0
      %s50 = sadd.s32 %s49, 1
      %s51 = scalar_select %p48, %s49, %s50
      %p54 = pneg %p48
      %p55 = scmp.eq.s32.totalorder %s18, 1
      %p56 = por %p54, %p55
      %p57 = scmp.ne.s32.totalorder %s49, %s52
      %p58 = scmp.eq.s32.totalorder %s18, 0
      %p59 = por %p57, %p58
      %p60 = scmp.ne.s32.totalorder %s49, %s52
      %p61 = scmp.eq.s32.totalorder %s23, 1
      %p62 = por %p60, %p61
      %p63 = scmp.ne.s32.totalorder %s52, %s53
      %p64 = scmp.eq.s32.totalorder %s23, 0
      %p65 = por %p63, %p64
      %p66 = scmp.ne.s32.totalorder %s52, %s53
      %p67 = scmp.eq.s32.totalorder %s24, 1
      %p68 = por %p66, %p67
      %p70 = scmp.ne.s32.totalorder %s53, %s69
      %p71 = scmp.eq.s32.totalorder %s24, 0
      %p72 = por %p70, %p71
      %s73 = ssub.s32 %s25, %s44
      %s74 = ssub.s32 %s27, %s36
      %s75 = sor.u32 %s73, %s74
      %p76 = scmp.eq.s32.totalorder %s75, 0
      %s78 = sadd.s32 %s77, 1
      %s79 = scalar_select %p76, %s77, %s78
      %p82 = pneg %p76
      %p83 = scmp.eq.s32.totalorder %s18, 1
      %p84 = por %p82, %p83
      %p85 = scmp.ne.s32.totalorder %s77, %s80
      %p86 = scmp.eq.s32.totalorder %s18, 0
      %p87 = por %p85, %p86
      %p88 = scmp.ne.s32.totalorder %s77, %s80
      %p89 = scmp.eq.s32.totalorder %s23, 1
      %p90 = por %p88, %p89
      %p91 = scmp.ne.s32.totalorder %s80, %s81
      %p92 = scmp.eq.s32.totalorder %s23, 0
      %p93 = por %p91, %p92
      %p94 = scmp.ne.s32.totalorder %s80, %s81
      %p95 = scmp.eq.s32.totalorder %s24, 1
      %p96 = por %p94, %p95
      %p98 = scmp.ne.s32.totalorder %s81, %s97
      %p99 = scmp.eq.s32.totalorder %s24, 0
      %p100 = por %p98, %p99
      %s101 = ssub.s32 %s25, %s44
      %s102 = ssub.s32 %s27, %s36
      %s103 = sor.u32 %s101, %s102
      %p104 = scmp.eq.s32.totalorder %s103, 0
      %s106 = sadd.s32 %s105, 1
      %s107 = scalar_select %p104, %s105, %s106
      %p110 = pneg %p104
      %p111 = scmp.eq.s32.totalorder %s18, 1
      %p112 = por %p110, %p111
      %p113 = scmp.ne.s32.totalorder %s105, %s108
      %p114 = scmp.eq.s32.totalorder %s18, 0
      %p115 = por %p113, %p114
      %p116 = scmp.ne.s32.totalorder %s105, %s108
      %p117 = scmp.eq.s32.totalorder %s23, 1
      %p118 = por %p116, %p117
      %p119 = scmp.ne.s32.totalorder %s108, %s109
      %p120 = scmp.eq.s32.totalorder %s23, 0
      %p121 = por %p119, %p120
      %p122 = scmp.ne.s32.totalorder %s108, %s109
      %p123 = scmp.eq.s32.totalorder %s24, 1
      %p124 = por %p122, %p123
      %p126 = scmp.ne.s32.totalorder %s109, %s125
      %p127 = scmp.eq.s32.totalorder %s24, 0
      %p128 = por %p126, %p127
      %s129 = ssub.s32 %s25, %s44
      %s130 = ssub.s32 %s26, %s40
      %s131 = sor.u32 %s129, %s130
      %s132 = ssub.s32 %s27, %s36
      %s133 = sor.u32 %s131, %s132
      %p134 = scmp.eq.s32.totalorder %s133, 0
      %s136 = sadd.s32 %s135, 1
      %s137 = scalar_select %p134, %s135, %s136
      %p140 = pneg %p134
      %p141 = scmp.eq.s32.totalorder %s18, 1
      %p142 = por %p140, %p141
      %p143 = scmp.ne.s32.totalorder %s135, %s138
      %p144 = scmp.eq.s32.totalorder %s18, 0
      %p145 = por %p143, %p144
      %p146 = scmp.ne.s32.totalorder %s135, %s138
      %p147 = scmp.eq.s32.totalorder %s23, 1
      %p148 = por %p146, %p147
      %p149 = scmp.ne.s32.totalorder %s138, %s139
      %p150 = scmp.eq.s32.totalorder %s23, 0
      %p151 = por %p149, %p150
      %p152 = scmp.ne.s32.totalorder %s138, %s139
      %p153 = scmp.eq.s32.totalorder %s24, 1
      %p154 = por %p152, %p153
      %p156 = scmp.ne.s32.totalorder %s139, %s155
      %p157 = scmp.eq.s32.totalorder %s24, 0
      %p158 = por %p156, %p157
      %p159 = scmp.le.s32.totalorder 1, %s18
      %p160 = scmp.lt.s32.totalorder %s18, 3
      %p161 = pnand %p159, %p160
      %p162 = pneg %p161
      // Predicated region
      $region9: #{tpu_custom_call.1} parent=5 // pred_check
        _
      $region10: #{tpu_custom_call.1} parent=5 // pred_check_branch
        %164 = sbr.rel (%p161) target = $region12
      $region11: #{tpu_custom_call.1} parent=5 // pred_region
        %s165 = ssub.s32 %s18, 1
      $region12: #{tpu_custom_call.1} parent=5 // pred_fallthru
        _
      %p166 = scmp.lt.s32.totalorder %s18, 2
      // Predicated region
      $region13: #{tpu_custom_call.1} parent=5 // pred_check
        %p167 = pneg %p166
      $region14: #{tpu_custom_call.1} parent=5 // pred_check_branch
        %169 = sbr.rel (%p167) target = $region16
      $region15: #{tpu_custom_call.1} parent=5 // pred_region
        // Predicated region
        $region17: #{tpu_custom_call.1} parent=15 // pred_check
          %p170 = pneg %p59
        $region18: #{tpu_custom_call.1} parent=15 // pred_check_branch
          %172 = sbr.rel (%p170) target = $region20
        $region19: #{tpu_custom_call.1} parent=15 // pred_region
          %s173 = sand.u32 %s49, 1
          %s174 = scalar_lea.sflag [#allocation3], %s173
          %s175 = sand.u32 %s49, 1
          %s176 = smul.addr %s175, 4
          %s177 = scalar_lea.vmem [#allocation2], %s176
          %s179 = ssub.s32 64, 64
          %180 = vsyncadd %s174, %s179
          %s181 = sadd.s32 %s26, %s25
          %s182 = smul.addr %s181, 64
          %s183 = scalar_lea.hbm %s0, %s182
          %s185 = sshll.u32 %s177, 4
          %s186 = int_to_ptr.vmem [resolvable:$true] %s185
          %188 = dma.hbm_to_vmem [thread:$0]  %s183, 64, %s186, %s174
        $region20: #{tpu_custom_call.1} parent=15 // pred_fallthru
          _
        // Predicated region
        $region21: #{tpu_custom_call.1} parent=15 // pred_check
          %p189 = pneg %p87
        $region22: #{tpu_custom_call.1} parent=15 // pred_check_branch
          %191 = sbr.rel (%p189) target = $region24
        $region23: #{tpu_custom_call.1} parent=15 // pred_region
          %s192 = sand.u32 %s18, 1
          %s193 = scalar_lea.sflag [#allocation6], %s192
          %s194 = sand.u32 %s77, 1
          %s195 = smul.addr %s194, 2
          %s196 = scalar_lea.vmem [#allocation5], %s195
          %s198 = ssub.s32 32, 32
          %199 = vsyncadd %s193, %s198
          %s200 = sadd.s32 %s27, %s25
          %s201 = smul.addr %s200, 32
          %s202 = scalar_lea.hbm %s1, %s201
          %s204 = sshll.u32 %s196, 4
          %s205 = int_to_ptr.vmem [resolvable:$true] %s204
          %207 = dma.hbm_to_vmem [thread:$0]  %s202, 32, %s205, %s193
        $region24: #{tpu_custom_call.1} parent=15 // pred_fallthru
          _
        // Predicated region
        $region25: #{tpu_custom_call.1} parent=15 // pred_check
          %p208 = pneg %p115
        $region26: #{tpu_custom_call.1} parent=15 // pred_check_branch
          %210 = sbr.rel (%p208) target = $region28
        $region27: #{tpu_custom_call.1} parent=15 // pred_region
          %s211 = sand.u32 %s18, 1
          %s212 = scalar_lea.sflag [#allocation6], %s211
          %s213 = sand.u32 %s105, 1
          %s214 = scalar_lea.vmem [#allocation7], %s213
          %s216 = ssub.s32 16, 16
          %217 = vsyncadd %s212, %s216
          %s218 = sadd.s32 %s27, %s25
          %s219 = smul.addr %s218, 16
          %s220 = scalar_lea.hbm %s2, %s219
          %s222 = sshll.u32 %s214, 4
          %s223 = int_to_ptr.vmem [resolvable:$true] %s222
          %225 = dma.hbm_to_vmem [thread:$0]  %s220, 16, %s223, %s212
        $region28: #{tpu_custom_call.1} parent=15 // pred_fallthru
          _
      $region16: #{tpu_custom_call.1} parent=5 // pred_fallthru
        _
      %p226 = scmp.le.s32.totalorder 1, %s18
      %p227 = scmp.lt.s32.totalorder %s18, 3
      %p228 = pnand %p226, %p227
      %p229 = pneg %p228
      // Predicated region
      $region29: #{tpu_custom_call.1} parent=5 // pred_check
        _
      $region30: #{tpu_custom_call.1} parent=5 // pred_check_branch
        %231 = sbr.rel (%p228) target = $region32
      $region31: #{tpu_custom_call.1} parent=5 // pred_region
        %s232 = ssub.s32 %s18, 1
        %s233 = sand.u32 %s52, 1
        %s234 = scalar_lea.sflag [#allocation3], %s233
        %s235 = sand.u32 %s52, 1
        %s236 = smul.addr %s235, 4
        %s237 = scalar_lea.vmem [#allocation2], %s236
        // Predicated region
        $region33: #{tpu_custom_call.1} parent=31 // pred_check
          %p238 = pneg %p65
        $region34: #{tpu_custom_call.1} parent=31 // pred_check_branch
          %240 = sbr.rel (%p238) target = $region36
        $region35: #{tpu_custom_call.1} parent=31 // pred_region
          %241 = dma.done %s234, 64
        $region36: #{tpu_custom_call.1} parent=31 // pred_fallthru
          _
        %s242 = sand.u32 %s23, 1
        %s243 = scalar_lea.sflag [#allocation6], %s242
        %s244 = sand.u32 %s80, 1
        %s245 = smul.addr %s244, 2
        %s246 = scalar_lea.vmem [#allocation5], %s245
        // Predicated region
        $region37: #{tpu_custom_call.1} parent=31 // pred_check
          %p247 = pneg %p93
        $region38: #{tpu_custom_call.1} parent=31 // pred_check_branch
          %249 = sbr.rel (%p247) target = $region40
        $region39: #{tpu_custom_call.1} parent=31 // pred_region
          %250 = dma.done %s243, 32
        $region40: #{tpu_custom_call.1} parent=31 // pred_fallthru
          _
        %s251 = sand.u32 %s23, 1
        %s252 = scalar_lea.sflag [#allocation6], %s251
        %s253 = sand.u32 %s108, 1
        %s254 = scalar_lea.vmem [#allocation7], %s253
        // Predicated region
        $region41: #{tpu_custom_call.1} parent=31 // pred_check
          %p255 = pneg %p121
        $region42: #{tpu_custom_call.1} parent=31 // pred_check_branch
          %257 = sbr.rel (%p255) target = $region44
        $region43: #{tpu_custom_call.1} parent=31 // pred_region
          %258 = dma.done %s252, 16
        $region44: #{tpu_custom_call.1} parent=31 // pred_fallthru
          _
        %s259 = sand.u32 %s52, 1
        %s260 = scalar_lea.sflag [#allocation3], %s259
        %s261 = sand.u32 %s52, 1
        %s262 = smul.addr %s261, 4
        %s263 = scalar_lea.vmem [#allocation2], %s262
        %p264 = pneg %p65
        %p265 = pneg %p62
        %s266 = sand.u32 %s23, 1
        %s267 = scalar_lea.sflag [#allocation6], %s266
        %s268 = sand.u32 %s80, 1
        %s269 = smul.addr %s268, 2
        %s270 = scalar_lea.vmem [#allocation5], %s269
        %p271 = pneg %p93
        %p272 = pneg %p90
        %s273 = sand.u32 %s23, 1
        %s274 = scalar_lea.sflag [#allocation6], %s273
        %s275 = sand.u32 %s108, 1
        %s276 = scalar_lea.vmem [#allocation7], %s275
        %p277 = pneg %p121
        %p278 = pneg %p118
        %p279 = pneg %p151
        %p280 = pneg %p148
        %s281 = sand.u32 %s138, 1
        %s282 = scalar_lea.sflag [#allocation4], %s281
        %s283 = sand.u32 %s138, 1
        %s284 = smul.addr %s283, 8
        %s285 = scalar_lea.vmem [#allocation8], %s284
        %v287 = vld [vmem:[%s237] sm:$0xf]
        %v288 = vld [vmem:[%s246] sm:$0x3]
        %vm289 = vcmask 23552
        %v291 = vsel %vm289, %v287, 0
        %vm293 = vcmask 1040384
        %vm294 = vcmask 1041408
        %v295 = vsel %vm293, 4294967295, 65535
        %v296 = vsel %vm294, %v295, 0
        %v298 = vand.u32 %v288, %v296
        %300 = vmatprep.subr.bf16.mxu0 0
        %301 = vmatpush1.bf16.msra.mxu0 %v298
        %302 = vmatprep.subr.bf16.mxu0 0
        %303 = vmatpush1.bf16.msra.mxu0 0
        %304 = vmatprep.subr.bf16.mxu0 0
        %305 = vmatpush1.bf16.msra.mxu0 0
        %306 = vmatprep.subr.bf16.mxu0 0
        %307 = vmatpush1.bf16.msra.mxu0 0
        %308 = vmatprep.subr.bf16.mxu0 0
        %309 = vmatpush1.bf16.msra.mxu0 0
        %310 = vmatprep.subr.bf16.mxu0 0
        %311 = vmatpush1.bf16.msra.mxu0 0
        %312 = vmatprep.subr.bf16.mxu0 0
        %313 = vmatpush1.bf16.msra.mxu0 0
        %314 = vmatprep.subr.bf16.mxu0 0
        %315 = vmatpush1.bf16.msra.mxu0 0
        %316 = vmatprep.subr.bf16.mxu0 0
        %317 = vmatpush1.bf16.msra.mxu0 0
        %318 = vmatprep.subr.bf16.mxu0 0
        %319 = vmatpush1.bf16.msra.mxu0 0
        %320 = vmatprep.subr.bf16.mxu0 0
        %321 = vmatpush1.bf16.msra.mxu0 0
        %322 = vmatprep.subr.bf16.mxu0 0
        %323 = vmatpush1.bf16.msra.mxu0 0
        %324 = vmatprep.subr.bf16.mxu0 0
        %325 = vmatpush1.bf16.msra.mxu0 0
        %326 = vmatprep.subr.bf16.mxu0 0
        %327 = vmatpush1.bf16.msra.mxu0 0
        %328 = vmatprep.subr.bf16.mxu0 0
        %329 = vmatpush1.bf16.msra.mxu0 0
        %330 = vmatprep.subr.bf16.mxu0 0
        %331 = vmatpush1.bf16.msra.mxu0 0
        %332 = vmatprep.mubr.bf16.mxu0 0
        %333 = vmatmul.mubr.bf16.gmra.mrb[0].mxu0 %v291
        %v334 = vpop.f32.mrb[0].mxu0
        %v335 = vadd.f32 0.0, %v334
        %v336 = vpop.f32.mrb[0].mxu0
        %v337 = vpop.f32.mrb[0].mxu0
        %v338 = vpop.f32.mrb[0].mxu0
        %339 = vdwg.mxu0
        %v340 = vld [vmem:[%s254] sm:$0x1]
        %v341 = vmul.f32 %v335, 2.0
        %v343 = vlaneseq
        %v344 = vshrl.u32 %v343, 7
        %v345 = vsub.s32 0, %v344
        %v346 = vrot.slane %v340, %v345
        %v348 = vsub.f32 %v346, %v341
        %vm349 = vcmask 261120
        %350 = vst.msk [vmem:[%s285] sm:$0xff] %vm349, %v348
        %s351 = sand.u32 %s138, 1
        %s352 = scalar_lea.sflag [#allocation4], %s351
        %s353 = sand.u32 %s138, 1
        %s354 = smul.addr %s353, 8
        %s355 = scalar_lea.vmem [#allocation8], %s354
        // Predicated region
        $region45: #{tpu_custom_call.1} parent=31 // pred_check
          %p356 = pneg %p148
        $region46: #{tpu_custom_call.1} parent=31 // pred_check_branch
          %358 = sbr.rel (%p356) target = $region48
        $region47: #{tpu_custom_call.1} parent=31 // pred_region
          %s360 = ssub.s32 128, 128
          %361 = vsyncadd %s352, %s360
          %s362 = sadd.s32 %s30, %s29
          %s363 = sadd.s32 %s362, %s28
          %s364 = smul.addr %s363, 128
          %s365 = scalar_lea.hbm %s3, %s364
          %s367 = sshll.u32 %s355, 4
          %s368 = int_to_ptr.vmem [resolvable:$true] %s367
          %370 = dma.vmem_to_hbm [thread:$0]  %s368, 128, %s365, %s352
        $region48: #{tpu_custom_call.1} parent=31 // pred_fallthru
          _
      $region32: #{tpu_custom_call.1} parent=5 // pred_fallthru
        _
      %p371 = scmp.le.s32.totalorder 2, %s18
      // Predicated region
      $region49: #{tpu_custom_call.1} parent=5 // pred_check
        %p372 = pneg %p371
      $region50: #{tpu_custom_call.1} parent=5 // pred_check_branch
        %374 = sbr.rel (%p372) target = $region52
      $region51: #{tpu_custom_call.1} parent=5 // pred_region
        %s375 = ssub.s32 %s18, 2
        // Predicated region
        $region53: #{tpu_custom_call.1} parent=51 // pred_check
          %p376 = pneg %p154
        $region54: #{tpu_custom_call.1} parent=51 // pred_check_branch
          %378 = sbr.rel (%p376) target = $region56
        $region55: #{tpu_custom_call.1} parent=51 // pred_region
          %s379 = sand.u32 %s139, 1
          %s380 = scalar_lea.sflag [#allocation4], %s379
          %s381 = sand.u32 %s139, 1
          %s382 = smul.addr %s381, 8
          %s383 = scalar_lea.vmem [#allocation8], %s382
          %384 = dma.done %s380, 128
        $region56: #{tpu_custom_call.1} parent=51 // pred_fallthru
          _
      $region52: #{tpu_custom_call.1} parent=5 // pred_fallthru
        _
    $region6: #{tpu_custom_call.1} parent=1 // loop_footer
      %s22 = sadd.s32 1, %s18
    $region7: #{tpu_custom_call.1} parent=1 // loop_footer_branch
      %17 = sbr.rel target = $region3
    $region8: #{tpu_custom_call.1} parent=1 // loop_exit
      _
    %385 = vsyncpa [#allocation3], 1
    %s386 = scalar_lea.sflag [#allocation3], 1
    %387 = vsyncpa %s386, 1
    %388 = vsyncpa [#allocation6], 1
    %s389 = scalar_lea.sflag [#allocation6], 1
    %390 = vsyncpa %s389, 1
    %391 = vsyncpa [#allocation4], 1
    %s392 = scalar_lea.sflag [#allocation4], 1
    %393 = vsyncpa %s392, 1

</llo_original>
